<compile_context>
chip_gen: v7x
topology: tpu7x:2x2x1
jax: 0.10.0
libtpu: 0.0.40
codegen_flags: <defaults>
</compile_context>

<pallas_src>
import jax
import jax.numpy as jnp
from jax.experimental import pallas as pl
from jax.experimental.pallas import tpu as pltpu


def _round_up(n, m):
    return ((n + m - 1) // m) * m


def _mlp_kernel(x_ref, w1_ref, b1_ref, w2_ref, b2_ref, w3_ref, b3_ref, o_ref):
    # x_ref: (4, TB) f32 -- batch on the lane axis, fully lane-dense.
    x = x_ref[...]
    w1 = w1_ref[...]                                    # (24, 4) f32

    # Layer 1 on the VPU: K=4 would waste most of an MXU push, so do 4
    # broadcast multiply-adds on the VALU slots instead (stays in f32).
    h1 = (w1[:, 0:1] * x[0:1, :]
          + w1[:, 1:2] * x[1:2, :]
          + w1[:, 2:3] * x[2:3, :]
          + w1[:, 3:4] * x[3:4, :]) + b1_ref[...]
    h1 = jnp.maximum(h1, 0.0)                           # (24, TB) f32

    # Layer 2 on the MXU: bf16 operands, f32 accumulation, bias/ReLU in f32.
    h2 = jnp.dot(w2_ref[...], h1.astype(jnp.bfloat16),
                 preferred_element_type=jnp.float32)    # (24, TB) f32
    h2 = jnp.maximum(h2 + b2_ref[...], 0.0)

    # Layer 3 on the MXU: bf16 operands, f32 accumulation, bias in f32.
    out = jnp.dot(w3_ref[...], h2.astype(jnp.bfloat16),
                  preferred_element_type=jnp.float32)   # (2, TB) f32
    o_ref[...] = (out + b3_ref[...]).astype(o_ref.dtype)


def mynet_forward_t(x_t, params, *, tile_b=32768):
    """Feature-major forward: x_t (4, B) float32 -> (2, B) float32.

    This is the layout the kernel wants (batch on lanes); callers that keep
    activations feature-major avoid all wrapper-side transpose passes.
    """
    w1, b1, w2, b2, w3, b3 = params
    F, B = x_t.shape
    assert F == 4

    # --- batch tiling -------------------------------------------------------
    # tile_b must be a lane multiple (it becomes the BlockSpec lane dim); also
    # cap it so double-buffered blocks + in-kernel temporaries fit comfortably
    # under the v7x 64 MiB physical VMEM (and our explicit 48 MiB limit).
    tile_b = max(128, min(_round_up(tile_b, 128), 65536))
    # Adaptive tile: choose the step count first, then size the tile so each
    # step pads at most 127 lanes (padded lanes cost real MXU time).
    n_steps = pl.cdiv(B, tile_b)
    if B >= 256:
        # Keep >=2 grid steps so a "parallel" batch axis can shard across the
        # two TensorCores of a v7x chip; no-op on single-TC v5e/v6e.
        n_steps = max(n_steps, 2)
    TB = _round_up(pl.cdiv(B, n_steps), 128)
    B_pad = TB * n_steps
    grid = (n_steps,)

    x_t = x_t.astype(jnp.float32)
    if B_pad != B:
        x_t = jnp.pad(x_t, ((0, 0), (0, B_pad - B)))

    # Weights: layer 1 stays f32 (VPU path); layers 2/3 are cast to bf16 once
    # here (MXU operands).  Biases are (out, 1) f32 columns so they broadcast
    # along the lane (batch) axis.
    w1f = w1.astype(jnp.float32)
    w2b = w2.astype(jnp.bfloat16)
    w3b = w3.astype(jnp.bfloat16)
    b1c = b1.reshape(-1, 1).astype(jnp.float32)
    b2c = b2.reshape(-1, 1).astype(jnp.float32)
    b3c = b3.reshape(-1, 1).astype(jnp.float32)

    # Activations walk the batch axis; weights/biases are pinned (constant
    # index_map) so they stay VMEM-resident and are not re-DMA'd per step.
    x_spec = pl.BlockSpec((4, TB), lambda i: (0, i))
    out_spec = pl.BlockSpec((2, TB), lambda i: (0, i))
    pinned = lambda a: pl.BlockSpec(a.shape, lambda i: (0, 0))

    flops = 2 * (4 * 24 + 24 * 24 + 24 * 2) * B_pad
    param_bytes = sum(int(a.size) * a.dtype.itemsize
                      for a in (w1f, b1c, w2b, b2c, w3b, b3c))
    bytes_accessed = 4 * (4 + 2) * B_pad + param_bytes

    out_t = pl.pallas_call(
        _mlp_kernel,
        out_shape=jax.ShapeDtypeStruct((2, B_pad), jnp.float32),
        grid=grid,
        in_specs=[x_spec,
                  pinned(w1f), pinned(b1c),
                  pinned(w2b), pinned(b2c),
                  pinned(w3b), pinned(b3c)],
        out_specs=out_spec,
        compiler_params=pltpu.CompilerParams(
            dimension_semantics=("parallel",),
            # v5e's default scoped VMEM is 16 MiB; explicit limit keeps the
            # large tile, while 48 MiB stays under v7x's 64 MiB physical VMEM.
            vmem_limit_bytes=48 * 1024 * 1024,
            # Allow XLA to fold the caller-side pad/transpose into the
            # activation operand instead of materializing it in HBM.
            allow_input_fusion=[True, False, False, False, False, False, False],
        ),
        cost_estimate=pl.CostEstimate(
            flops=flops, transcendentals=0, bytes_accessed=bytes_accessed),
    )(x_t, w1f, b1c, w2b, b2c, w3b, b3c)

    return out_t[:, :B]


def mynet_forward(x, params, *, tile_b=32768):
    """Batch-major forward matching torch semantics: x (B, 4) -> (B, 2).

    Prefer mynet_forward_t when the caller can keep activations feature-major;
    the transposes here are an extra layout pass over the activations.
    """
    B, F = x.shape
    assert F == 4
    out_t = mynet_forward_t(x.astype(jnp.float32).T, params, tile_b=tile_b)
    return out_t.T


def init_params(key):
    """Deterministic init mimicking torch.nn.Linear (uniform +/- 1/sqrt(fan_in)).

    Weights are kept in torch layout: W (out_features, in_features), b (out,).
    """
    ks = jax.random.split(key, 6)

    def linear(kw, kb, fan_in, fan_out):
        bound = float(fan_in) ** -0.5
        w = jax.random.uniform(kw, (fan_out, fan_in), jnp.float32, -bound, bound)
        b = jax.random.uniform(kb, (fan_out,), jnp.float32, -bound, bound)
        return w, b

    w1, b1 = linear(ks[0], ks[1], 4, 24)
    w2, b2 = linear(ks[2], ks[3], 24, 24)
    w3, b3 = linear(ks[4], ks[5], 24, 2)
    return (w1, b1, w2, b2, w3, b3)


if __name__ == "__main__":
    key = jax.random.PRNGKey(0)
    k_params, k_x = jax.random.split(key)

    params = init_params(k_params)

    B = 8  # small batch
    x = jax.random.normal(k_x, (B, 4), dtype=jnp.float32)

    out = jax.block_until_ready(mynet_forward(x, params))

    # Reference: plain-JAX version of torch's x @ W.T + b chain (f32).
    w1, b1, w2, b2, w3, b3 = params
    ref = jnp.maximum(x @ w1.T + b1, 0.0)
    ref = jnp.maximum(ref @ w2.T + b2, 0.0)
    ref = ref @ w3.T + b3

    assert out.shape == (B, 2)
    # Layers 2/3 use bf16 MXU operands (f32 accumulation), so compare against
    # the f32 reference with a relaxed tolerance.
    assert jnp.allclose(out, ref, rtol=2e-2, atol=2e-2), "mismatch vs reference"

    print("KERNEL_OK")
</pallas_src>

<mosaic_0001>
module attributes {stable_mosaic.version = 11 : i64} {
  func.func @_mlp_kernel(%arg0: i32, %arg1: memref<4x128xf32, #tpu.memory_space<vmem>>, %arg2: memref<24x4xf32, #tpu.memory_space<vmem>>, %arg3: memref<24x1xf32, #tpu.memory_space<vmem>>, %arg4: memref<24x24xbf16, #tpu.memory_space<vmem>>, %arg5: memref<24x1xf32, #tpu.memory_space<vmem>>, %arg6: memref<2x24xbf16, #tpu.memory_space<vmem>>, %arg7: memref<2x1xf32, #tpu.memory_space<vmem>>, %arg8: memref<2x128xf32, #tpu.memory_space<vmem>>) attributes {dimension_semantics = [#tpu.dimension_semantics<parallel>], iteration_bounds = array<i64: 1>, scalar_prefetch = 0 : i64, scratch_operands = 0 : i64, tpu.core_type = #tpu.core_type<tc>, window_params = [{transform_indices = @transform_0, window_bounds = array<i64: 4, 128>}, {pipeline_mode = #tpu.pipeline_mode<synchronous>, transform_indices = @transform_1, window_bounds = array<i64: 24, 4>}, {pipeline_mode = #tpu.pipeline_mode<synchronous>, transform_indices = @transform_2, window_bounds = array<i64: 24, 1>}, {pipeline_mode = #tpu.pipeline_mode<synchronous>, transform_indices = @transform_3, window_bounds = array<i64: 24, 24>}, {pipeline_mode = #tpu.pipeline_mode<synchronous>, transform_indices = @transform_4, window_bounds = array<i64: 24, 1>}, {pipeline_mode = #tpu.pipeline_mode<synchronous>, transform_indices = @transform_5, window_bounds = array<i64: 2, 24>}, {pipeline_mode = #tpu.pipeline_mode<synchronous>, transform_indices = @transform_6, window_bounds = array<i64: 2, 1>}, {transform_indices = @transform_7, window_bounds = array<i64: 2, 128>}]} {
    %c0 = arith.constant 0 : index
    %c0_0 = arith.constant 0 : index
    %0 = vector.load %arg1[%c0, %c0_0] : memref<4x128xf32, #tpu.memory_space<vmem>>, vector<4x128xf32>
    %c0_1 = arith.constant 0 : index
    %c0_2 = arith.constant 0 : index
    %1 = vector.load %arg2[%c0_1, %c0_2] : memref<24x4xf32, #tpu.memory_space<vmem>>, vector<24x4xf32>
    %2 = vector.extract_strided_slice %1 {offsets = [0, 0], sizes = [24, 1], strides = [1, 1]} : vector<24x4xf32> to vector<24x1xf32>
    %3 = vector.extract_strided_slice %0 {offsets = [0, 0], sizes = [1, 128], strides = [1, 1]} : vector<4x128xf32> to vector<1x128xf32>
    %4 = vector.broadcast %2 : vector<24x1xf32> to vector<24x128xf32>
    %5 = vector.broadcast %3 : vector<1x128xf32> to vector<24x128xf32>
    %6 = arith.mulf %4, %5 : vector<24x128xf32>
    %7 = vector.extract_strided_slice %1 {offsets = [0, 1], sizes = [24, 1], strides = [1, 1]} : vector<24x4xf32> to vector<24x1xf32>
    %8 = vector.extract_strided_slice %0 {offsets = [1, 0], sizes = [1, 128], strides = [1, 1]} : vector<4x128xf32> to vector<1x128xf32>
    %9 = vector.broadcast %7 : vector<24x1xf32> to vector<24x128xf32>
    %10 = vector.broadcast %8 : vector<1x128xf32> to vector<24x128xf32>
    %11 = arith.mulf %9, %10 : vector<24x128xf32>
    %12 = arith.addf %6, %11 : vector<24x128xf32>
    %13 = vector.extract_strided_slice %1 {offsets = [0, 2], sizes = [24, 1], strides = [1, 1]} : vector<24x4xf32> to vector<24x1xf32>
    %14 = vector.extract_strided_slice %0 {offsets = [2, 0], sizes = [1, 128], strides = [1, 1]} : vector<4x128xf32> to vector<1x128xf32>
    %15 = vector.broadcast %13 : vector<24x1xf32> to vector<24x128xf32>
    %16 = vector.broadcast %14 : vector<1x128xf32> to vector<24x128xf32>
    %17 = arith.mulf %15, %16 : vector<24x128xf32>
    %18 = arith.addf %12, %17 : vector<24x128xf32>
    %19 = vector.extract_strided_slice %1 {offsets = [0, 3], sizes = [24, 1], strides = [1, 1]} : vector<24x4xf32> to vector<24x1xf32>
    %20 = vector.extract_strided_slice %0 {offsets = [3, 0], sizes = [1, 128], strides = [1, 1]} : vector<4x128xf32> to vector<1x128xf32>
    %21 = vector.broadcast %19 : vector<24x1xf32> to vector<24x128xf32>
    %22 = vector.broadcast %20 : vector<1x128xf32> to vector<24x128xf32>
    %23 = arith.mulf %21, %22 : vector<24x128xf32>
    %24 = arith.addf %18, %23 : vector<24x128xf32>
    %c0_3 = arith.constant 0 : index
    %c0_4 = arith.constant 0 : index
    %25 = vector.load %arg3[%c0_3, %c0_4] : memref<24x1xf32, #tpu.memory_space<vmem>>, vector<24x1xf32>
    %26 = vector.broadcast %25 : vector<24x1xf32> to vector<24x128xf32>
    %27 = arith.addf %24, %26 : vector<24x128xf32>
    %cst = arith.constant 0.000000e+00 : f32
    %28 = vector.broadcast %cst : f32 to vector<24x128xf32>
    %29 = arith.maximumf %27, %28 : vector<24x128xf32>
    %c0_5 = arith.constant 0 : index
    %c0_6 = arith.constant 0 : index
    %30 = vector.load %arg4[%c0_5, %c0_6] : memref<24x24xbf16, #tpu.memory_space<vmem>>, vector<24x24xbf16>
    %31 = arith.truncf %29 : vector<24x128xf32> to vector<24x128xbf16>
    %cst_7 = arith.constant dense<0.000000e+00> : vector<24x128xf32>
    %32 = tpu.matmul %30, %31, %cst_7 {dimension_numbers = #tpu.dot_dimension_numbers<[1], [0], [0], [1], [0, 0, 1, 1], [], []>} : vector<24x24xbf16>, vector<24x128xbf16>, vector<24x128xf32> -> vector<24x128xf32>
    %c0_8 = arith.constant 0 : index
    %c0_9 = arith.constant 0 : index
    %33 = vector.load %arg5[%c0_8, %c0_9] : memref<24x1xf32, #tpu.memory_space<vmem>>, vector<24x1xf32>
    %34 = vector.broadcast %33 : vector<24x1xf32> to vector<24x128xf32>
    %35 = arith.addf %32, %34 : vector<24x128xf32>
    %cst_10 = arith.constant 0.000000e+00 : f32
    %36 = vector.broadcast %cst_10 : f32 to vector<24x128xf32>
    %37 = arith.maximumf %35, %36 : vector<24x128xf32>
    %c0_11 = arith.constant 0 : index
    %c0_12 = arith.constant 0 : index
    %38 = vector.load %arg6[%c0_11, %c0_12] : memref<2x24xbf16, #tpu.memory_space<vmem>>, vector<2x24xbf16>
    %39 = arith.truncf %37 : vector<24x128xf32> to vector<24x128xbf16>
    %cst_13 = arith.constant dense<0.000000e+00> : vector<2x128xf32>
    %40 = tpu.matmul %38, %39, %cst_13 {dimension_numbers = #tpu.dot_dimension_numbers<[1], [0], [0], [1], [0, 0, 1, 1], [], []>} : vector<2x24xbf16>, vector<24x128xbf16>, vector<2x128xf32> -> vector<2x128xf32>
    %c0_14 = arith.constant 0 : index
    %c0_15 = arith.constant 0 : index
    %41 = vector.load %arg7[%c0_14, %c0_15] : memref<2x1xf32, #tpu.memory_space<vmem>>, vector<2x1xf32>
    %42 = vector.broadcast %41 : vector<2x1xf32> to vector<2x128xf32>
    %43 = arith.addf %40, %42 : vector<2x128xf32>
    %c0_16 = arith.constant 0 : index
    %c0_17 = arith.constant 0 : index
    %44 = vector.load %arg8[%c0_16, %c0_17] : memref<2x128xf32, #tpu.memory_space<vmem>>, vector<2x128xf32>
    tpu.vector_store %arg8[%c0_16, %c0_17], %43 {strides = array<i32>} : memref<2x128xf32, #tpu.memory_space<vmem>>, vector<2x128xf32>,
    return
  }
  func.func @transform_0(%arg0: i32) -> (i32, i32) {
    %c0_i32 = arith.constant 0 : i32
    %c0_i32_0 = arith.constant 0 : i32
    return %c0_i32, %arg0 : i32, i32
  }
  func.func @transform_1(%arg0: i32) -> (i32, i32) {
    %c0_i32 = arith.constant 0 : i32
    %c0_i32_0 = arith.constant 0 : i32
    %c0_i32_1 = arith.constant 0 : i32
    return %c0_i32, %c0_i32_0 : i32, i32
  }
  func.func @transform_2(%arg0: i32) -> (i32, i32) {
    %c0_i32 = arith.constant 0 : i32
    %c0_i32_0 = arith.constant 0 : i32
    %c0_i32_1 = arith.constant 0 : i32
    return %c0_i32, %c0_i32_0 : i32, i32
  }
  func.func @transform_3(%arg0: i32) -> (i32, i32) {
    %c0_i32 = arith.constant 0 : i32
    %c0_i32_0 = arith.constant 0 : i32
    %c0_i32_1 = arith.constant 0 : i32
    return %c0_i32, %c0_i32_0 : i32, i32
  }
  func.func @transform_4(%arg0: i32) -> (i32, i32) {
    %c0_i32 = arith.constant 0 : i32
    %c0_i32_0 = arith.constant 0 : i32
    %c0_i32_1 = arith.constant 0 : i32
    return %c0_i32, %c0_i32_0 : i32, i32
  }
  func.func @transform_5(%arg0: i32) -> (i32, i32) {
    %c0_i32 = arith.constant 0 : i32
    %c0_i32_0 = arith.constant 0 : i32
    %c0_i32_1 = arith.constant 0 : i32
    return %c0_i32, %c0_i32_0 : i32, i32
  }
  func.func @transform_6(%arg0: i32) -> (i32, i32) {
    %c0_i32 = arith.constant 0 : i32
    %c0_i32_0 = arith.constant 0 : i32
    %c0_i32_1 = arith.constant 0 : i32
    return %c0_i32, %c0_i32_0 : i32, i32
  }
  func.func @transform_7(%arg0: i32) -> (i32, i32) {
    %c0_i32 = arith.constant 0 : i32
    %c0_i32_0 = arith.constant 0 : i32
    return %c0_i32, %arg0 : i32, i32
  }
}

</mosaic_0001>

<llo_original>
// kernel: tpu_custom_call.1
$region0: #{tpu_custom_call.1}
  #allocation0 [shape = 'u32[]', space=smem, size = 0x4, offset = 0x4, fixed_abs, tag = 'smem constant byte address 0x4 - core index']
  #allocation1 [shape = 'u32[144,128]{1,0:T(1,128)}', space=vmem, size = 0x12000, scoped, tag = 'internal scratch']
  %s0 = inlined_call_operand.vmem [shape: f32[4,128], index: 0, kind: input, shape index: {}]
  %s1 = inlined_call_operand.vmem [shape: f32[24,4], index: 1, kind: input, shape index: {}]
  %s2 = inlined_call_operand.vmem [shape: f32[24,1], index: 2, kind: input, shape index: {}]
  %s3 = inlined_call_operand.vmem [shape: bf16[24,24], index: 3, kind: input, shape index: {}]
  %s4 = inlined_call_operand.vmem [shape: f32[24,1], index: 4, kind: input, shape index: {}]
  %s5 = inlined_call_operand.vmem [shape: bf16[2,24], index: 5, kind: input, shape index: {}]
  %s6 = inlined_call_operand.vmem [shape: f32[2,1], index: 6, kind: input, shape index: {}]
  %s7 = inlined_call_operand.hbm [shape: f32[2,128], index: 7, kind: output, shape index: {}]
  %s8 = sld [smem:[#allocation0]]
  $region38: #{tpu_custom_call.1} parent=0
    _
  %s10 = ssub.s32 1, %s8
  %s11 = scalar_select 0, %s10, %s8
  $region1: #{tpu_custom_call.1} parent=0
    #allocation2 [shape = 'u8[1024]{0}', space=vmem, size = 0x400, scoped, tag = 'output window, operand 0, single buffered']
    #allocation3 [shape = 's32[1]{0}', space=sflag, size = 0x4, scoped, tag = 'scoped memory for tpu_custom_call.1']
    %12 = vsyncpa [#allocation3], 0
    // Predicated region
    $region2: #{tpu_custom_call.1} parent=1 // pred_check
      _
    $region3: #{tpu_custom_call.1} parent=1 // pred_check_branch
      %14 = sbr.rel (0) target = $region5
    $region4: #{tpu_custom_call.1} parent=1 // pred_region
      _
    $region5: #{tpu_custom_call.1} parent=1 // pred_fallthru
      _
    // Predicated region
    $region6: #{tpu_custom_call.1} parent=1 // pred_check
      _
    $region7: #{tpu_custom_call.1} parent=1 // pred_check_branch
      %16 = sbr.rel (0) target = $region9
    $region8: #{tpu_custom_call.1} parent=1 // pred_region
      _
    $region9: #{tpu_custom_call.1} parent=1 // pred_fallthru
      _
    // Predicated region
    $region10: #{tpu_custom_call.1} parent=1 // pred_check
      _
    $region11: #{tpu_custom_call.1} parent=1 // pred_check_branch
      %18 = sbr.rel (0) target = $region13
    $region12: #{tpu_custom_call.1} parent=1 // pred_region
      _
    $region13: #{tpu_custom_call.1} parent=1 // pred_fallthru
      _
    // Predicated region
    $region14: #{tpu_custom_call.1} parent=1 // pred_check
      _
    $region15: #{tpu_custom_call.1} parent=1 // pred_check_branch
      %20 = sbr.rel (0) target = $region17
    $region16: #{tpu_custom_call.1} parent=1 // pred_region
      _
    $region17: #{tpu_custom_call.1} parent=1 // pred_fallthru
      _
    // Predicated region
    $region18: #{tpu_custom_call.1} parent=1 // pred_check
      _
    $region19: #{tpu_custom_call.1} parent=1 // pred_check_branch
      %22 = sbr.rel (0) target = $region21
    $region20: #{tpu_custom_call.1} parent=1 // pred_region
      _
    $region21: #{tpu_custom_call.1} parent=1 // pred_fallthru
      _
    // Predicated region
    $region22: #{tpu_custom_call.1} parent=1 // pred_check
      _
    $region23: #{tpu_custom_call.1} parent=1 // pred_check_branch
      %24 = sbr.rel (0) target = $region25
    $region24: #{tpu_custom_call.1} parent=1 // pred_region
      _
    $region25: #{tpu_custom_call.1} parent=1 // pred_fallthru
      _
    // Predicated region
    $region26: #{tpu_custom_call.1} parent=1 // pred_check
      _
    $region27: #{tpu_custom_call.1} parent=1 // pred_check_branch
      %26 = sbr.rel (0) target = $region29
    $region28: #{tpu_custom_call.1} parent=1 // pred_region
      _
    $region29: #{tpu_custom_call.1} parent=1 // pred_fallthru
      _
    %v28 = vld [vmem:[%s0] sm:$0xf]
    %v29 = vld [vmem:[%s1] sm:$0xff]
    %v30 = vld [vmem:[%s1 + $0x8] sm:$0xff]
    %v31 = vld [vmem:[%s1 + $0x10] sm:$0xff]
    %33 = vset.pattern.permute.xlu0 0
    %34 = vperm.xlu0 %33, %v29
    %v35 = vpop.permute.xlu0 %34
    %38 = vset.pattern.permute.xlu0 0
    %39 = vperm.xlu0 %38, %v30
    %v40 = vpop.permute.xlu0 %39
    %43 = vset.pattern.permute.xlu0 0
    %44 = vperm.xlu0 %43, %v31
    %v45 = vpop.permute.xlu0 %44
    %v47 = vlaneseq
    %v48 = vshrl.u32 %v47, 7
    %v49 = vsub.s32 0, %v48
    %v50 = vrot.slane %v28, %v49
    %v51 = vmul.f32 %v35, %v50
    %v52 = vmul.f32 %v40, %v50
    %v53 = vmul.f32 %v45, %v50
    %54 = vset.pattern.permute.xlu0 1
    %55 = vperm.xlu0 %54, %v29
    %v56 = vpop.permute.xlu0 %55
    %58 = vset.pattern.permute.xlu0 1
    %59 = vperm.xlu0 %58, %v30
    %v60 = vpop.permute.xlu0 %59
    %62 = vset.pattern.permute.xlu0 1
    %63 = vperm.xlu0 %62, %v31
    %v64 = vpop.permute.xlu0 %63
    %v66 = vlaneseq
    %v67 = vshrl.u32 %v66, 7
    %v68 = vsub.s32 1, %v67
    %v69 = vrot.slane %v28, %v68
    %v70 = vmul.f32 %v56, %v69
    %v71 = vmul.f32 %v60, %v69
    %v72 = vmul.f32 %v64, %v69
    %v73 = vadd.f32 %v51, %v70
    %v74 = vadd.f32 %v52, %v71
    %v75 = vadd.f32 %v53, %v72
    %76 = vset.pattern.permute.xlu0 2
    %77 = vperm.xlu0 %76, %v29
    %v78 = vpop.permute.xlu0 %77
    %80 = vset.pattern.permute.xlu0 2
    %81 = vperm.xlu0 %80, %v30
    %v82 = vpop.permute.xlu0 %81
    %84 = vset.pattern.permute.xlu0 2
    %85 = vperm.xlu0 %84, %v31
    %v86 = vpop.permute.xlu0 %85
    %v88 = vlaneseq
    %v89 = vshrl.u32 %v88, 7
    %v90 = vsub.s32 2, %v89
    %v91 = vrot.slane %v28, %v90
    %v92 = vmul.f32 %v78, %v91
    %v93 = vmul.f32 %v82, %v91
    %v94 = vmul.f32 %v86, %v91
    %v95 = vadd.f32 %v73, %v92
    %v96 = vadd.f32 %v74, %v93
    %v97 = vadd.f32 %v75, %v94
    %98 = vset.pattern.permute.xlu0 3
    %99 = vperm.xlu0 %98, %v29
    %v100 = vpop.permute.xlu0 %99
    %102 = vset.pattern.permute.xlu0 3
    %103 = vperm.xlu0 %102, %v30
    %v104 = vpop.permute.xlu0 %103
    %106 = vset.pattern.permute.xlu0 3
    %107 = vperm.xlu0 %106, %v31
    %v108 = vpop.permute.xlu0 %107
    %v110 = vlaneseq
    %v111 = vshrl.u32 %v110, 7
    %v112 = vsub.s32 3, %v111
    %v113 = vrot.slane %v28, %v112
    %v114 = vmul.f32 %v100, %v113
    %v115 = vmul.f32 %v104, %v113
    %v116 = vmul.f32 %v108, %v113
    %v117 = vadd.f32 %v95, %v114
    %v118 = vadd.f32 %v96, %v115
    %v119 = vadd.f32 %v97, %v116
    %v120 = vld [vmem:[%s2] sm:$0xff]
    %v121 = vld [vmem:[%s2 + $0x8] sm:$0xff]
    %v122 = vld [vmem:[%s2 + $0x10] sm:$0xff]
    %124 = vset.pattern.permute.xlu0 0
    %125 = vperm.xlu0 %124, %v120
    %v126 = vpop.permute.xlu0 %125
    %129 = vset.pattern.permute.xlu0 0
    %130 = vperm.xlu0 %129, %v121
    %v131 = vpop.permute.xlu0 %130
    %134 = vset.pattern.permute.xlu0 0
    %135 = vperm.xlu0 %134, %v122
    %v136 = vpop.permute.xlu0 %135
    %v138 = vadd.f32 %v117, %v126
    %v139 = vadd.f32 %v118, %v131
    %v140 = vadd.f32 %v119, %v136
    %v141 = vmax.f32 %v138, 0.0
    %v142 = vmax.f32 %v139, 0.0
    %v143 = vmax.f32 %v140, 0.0
    %v144 = vld [vmem:[%s3] sm:$0xf]
    %v145 = vld [vmem:[%s3 + $0x4] sm:$0xf]
    %v146 = vld [vmem:[%s3 + $0x8] sm:$0xf]
    %v147 = vpack.c.bf16 %v142, %v141
    %v148 = vpack.c.bf16 %v143, %v143
    %v149 = vld [vmem:[%s4] sm:$0xff]
    %v150 = vld [vmem:[%s4 + $0x8] sm:$0xff]
    %v151 = vld [vmem:[%s4 + $0x10] sm:$0xff]
    %153 = vset.pattern.permute.xlu0 0
    %154 = vperm.xlu0 %153, %v149
    %v155 = vpop.permute.xlu0 %154
    %158 = vset.pattern.permute.xlu0 0
    %159 = vperm.xlu0 %158, %v150
    %v160 = vpop.permute.xlu0 %159
    %163 = vset.pattern.permute.xlu0 0
    %164 = vperm.xlu0 %163, %v151
    %v165 = vpop.permute.xlu0 %164
    %v170 = vunpack.c.l.b16 %v144
    %v171 = vunpack.c.l.b16 %v145
    %v172 = vunpack.c.l.b16 %v146
    %v173 = vpack.c.b16 %v171, %v170
    %v174 = vpack.c.b16 %v172, %v172
    %vm175 = vcmask 195584
    %v177 = vsel %vm175, %v173, 0
    %v180 = vsel %vm175, %v174, 0
    %vm182 = vcmask 1043456
    %v184 = vsel %vm182, %v148, 0
    %186 = vmatprep.subr.bf16.mxu0 0
    %187 = vmatpush1.bf16.msra.mxu0 %v147
    %188 = vmatprep.subr.bf16.mxu0 0
    %189 = vmatpush1.bf16.msra.mxu0 %v184
    %190 = vmatprep.subr.bf16.mxu0 0
    %191 = vmatpush1.bf16.msra.mxu0 0
    %192 = vmatprep.subr.bf16.mxu0 0
    %193 = vmatpush1.bf16.msra.mxu0 0
    %194 = vmatprep.subr.bf16.mxu0 0
    %195 = vmatpush1.bf16.msra.mxu0 0
    %196 = vmatprep.subr.bf16.mxu0 0
    %197 = vmatpush1.bf16.msra.mxu0 0
    %198 = vmatprep.subr.bf16.mxu0 0
    %199 = vmatpush1.bf16.msra.mxu0 0
    %200 = vmatprep.subr.bf16.mxu0 0
    %201 = vmatpush1.bf16.msra.mxu0 0
    %202 = vmatprep.subr.bf16.mxu0 0
    %203 = vmatpush1.bf16.msra.mxu0 0
    %204 = vmatprep.subr.bf16.mxu0 0
    %205 = vmatpush1.bf16.msra.mxu0 0
    %206 = vmatprep.subr.bf16.mxu0 0
    %207 = vmatpush1.bf16.msra.mxu0 0
    %208 = vmatprep.subr.bf16.mxu0 0
    %209 = vmatpush1.bf16.msra.mxu0 0
    %210 = vmatprep.subr.bf16.mxu0 0
    %211 = vmatpush1.bf16.msra.mxu0 0
    %212 = vmatprep.subr.bf16.mxu0 0
    %213 = vmatpush1.bf16.msra.mxu0 0
    %214 = vmatprep.subr.bf16.mxu0 0
    %215 = vmatpush1.bf16.msra.mxu0 0
    %216 = vmatprep.subr.bf16.mxu0 0
    %217 = vmatpush1.bf16.msra.mxu0 0
    %218 = vmatprep.mubr.bf16.mxu0 0
    %219 = vmatmul.mubr.bf16.gmra.mrb[0].mxu0 %v177
    %v220 = vpop.f32.mrb[0].mxu0
    %v221 = vadd.f32 %v155, %v220
    %v222 = vpop.f32.mrb[0].mxu0
    %v223 = vpop.f32.mrb[0].mxu0
    %v224 = vadd.f32 %v160, %v223
    %v225 = vpop.f32.mrb[0].mxu0
    %226 = vmatprep.mubr.bf16.mxu0 0
    %227 = vmatmul.mubr.bf16.gmra.mrb[0].mxu0 %v180
    %v228 = vpop.f32.mrb[0].mxu0
    %v229 = vadd.f32 %v165, %v228
    %v230 = vpop.f32.mrb[0].mxu0
    %v231 = vpop.f32.mrb[0].mxu0
    %v232 = vpop.f32.mrb[0].mxu0
    %233 = vdwg.mxu0
    %v234 = vmax.f32 %v221, 0.0
    %v235 = vmax.f32 %v224, 0.0
    %v236 = vmax.f32 %v229, 0.0
    %v237 = vld [vmem:[%s5] sm:$0x1]
    %v238 = vpack.c.bf16 %v235, %v234
    %v239 = vpack.c.bf16 %v236, %v236
    %v240 = vld [vmem:[%s6] sm:$0x3]
    %242 = vset.pattern.permute.xlu0 0
    %243 = vperm.xlu0 %242, %v240
    %v244 = vpop.permute.xlu0 %243
    %v247 = vsel %vm175, %v237, 0
    %v250 = vsel %vm182, %v239, 0
    %252 = vmatprep.subr.bf16.mxu0 0
    %253 = vmatpush1.bf16.msra.mxu0 %v238
    %254 = vmatprep.subr.bf16.mxu0 0
    %255 = vmatpush1.bf16.msra.mxu0 %v250
    %256 = vmatprep.subr.bf16.mxu0 0
    %257 = vmatpush1.bf16.msra.mxu0 0
    %258 = vmatprep.subr.bf16.mxu0 0
    %259 = vmatpush1.bf16.msra.mxu0 0
    %260 = vmatprep.subr.bf16.mxu0 0
    %261 = vmatpush1.bf16.msra.mxu0 0
    %262 = vmatprep.subr.bf16.mxu0 0
    %263 = vmatpush1.bf16.msra.mxu0 0
    %264 = vmatprep.subr.bf16.mxu0 0
    %265 = vmatpush1.bf16.msra.mxu0 0
    %266 = vmatprep.subr.bf16.mxu0 0
    %267 = vmatpush1.bf16.msra.mxu0 0
    %268 = vmatprep.subr.bf16.mxu0 0
    %269 = vmatpush1.bf16.msra.mxu0 0
    %270 = vmatprep.subr.bf16.mxu0 0
    %271 = vmatpush1.bf16.msra.mxu0 0
    %272 = vmatprep.subr.bf16.mxu0 0
    %273 = vmatpush1.bf16.msra.mxu0 0
    %274 = vmatprep.subr.bf16.mxu0 0
    %275 = vmatpush1.bf16.msra.mxu0 0
    %276 = vmatprep.subr.bf16.mxu0 0
    %277 = vmatpush1.bf16.msra.mxu0 0
    %278 = vmatprep.subr.bf16.mxu0 0
    %279 = vmatpush1.bf16.msra.mxu0 0
    %280 = vmatprep.subr.bf16.mxu0 0
    %281 = vmatpush1.bf16.msra.mxu0 0
    %282 = vmatprep.subr.bf16.mxu0 0
    %283 = vmatpush1.bf16.msra.mxu0 0
    %284 = vmatprep.mubr.bf16.mxu0 0
    %285 = vmatmul.mubr.bf16.gmra.mrb[0].mxu0 %v247
    %v286 = vpop.f32.mrb[0].mxu0
    %v287 = vadd.f32 %v244, %v286
    %v288 = vpop.f32.mrb[0].mxu0
    %v289 = vpop.f32.mrb[0].mxu0
    %v290 = vpop.f32.mrb[0].mxu0
    %291 = vdwg.mxu0
    %292 = vst [vmem:[#allocation2] sm:$0x3] %v287
    // Predicated region
    $region30: #{tpu_custom_call.1} parent=1 // pred_check
      _
    $region31: #{tpu_custom_call.1} parent=1 // pred_check_branch
      %294 = sbr.rel (0) target = $region33
    $region32: #{tpu_custom_call.1} parent=1 // pred_region
      %s296 = ssub.s32 32, 32
      %297 = vsyncadd [#allocation3], %s296
      %s299 = sshll.u32 [#allocation2], 4
      %s300 = int_to_ptr.vmem [resolvable:$true] %s299
      %302 = dma.vmem_to_hbm [thread:$0]  %s300, 32, %s7, [#allocation3]
    $region33: #{tpu_custom_call.1} parent=1 // pred_fallthru
      _
    // Predicated region
    $region34: #{tpu_custom_call.1} parent=1 // pred_check
      _
    $region35: #{tpu_custom_call.1} parent=1 // pred_check_branch
      %304 = sbr.rel (0) target = $region37
    $region36: #{tpu_custom_call.1} parent=1 // pred_region
      %305 = dma.done [#allocation3], 32
    $region37: #{tpu_custom_call.1} parent=1 // pred_fallthru
      _
    %306 = vsyncpa [#allocation3], 1

</llo_original>
